<compile_context>
chip_gen: v6e
topology: v6e:2x2x1
jax: 0.10.0
libtpu: 0.0.40
codegen_flags: <defaults>
</compile_context>

<pallas_src>
import jax
import jax.numpy as jnp
from jax.experimental import pallas as pl
from jax.experimental.pallas import tpu as pltpu

_LANE = 128     # TPU lane width (last dim)
_SUBLANE = 8    # TPU sublane width (second-to-last dim)


def _round_up(x, m):
    return ((x + m - 1) // m) * m


def _linear_kernel(x_ref, w_ref, b_ref, o_ref):
    # x_ref: (tb, n_latent)      activation tile (pipelined over the batch grid)
    # w_ref: (n_latent, N_pad)   lane-padded weight, resident in VMEM
    # b_ref: (1, N_pad)          lane-padded bias, resident in VMEM
    # o_ref: (tb, num_of_class)  narrow (unpadded) output tile
    acc = jnp.dot(x_ref[...], w_ref[...], preferred_element_type=jnp.float32)
    acc = acc + b_ref[...]                       # lane-dense add (VPU has slack)
    n = o_ref.shape[-1]
    o_ref[...] = acc[:, :n].astype(o_ref.dtype)  # only the real classes hit HBM


def net_cell_forward(embedding, weight, bias, *, block_batch=4096, use_pallas=None):
    """Forward pass of Net_cell: out = embedding @ weight + bias.

    embedding: (B, n_latent); weight: (n_latent, num_of_class); bias: (num_of_class,).
    `weight` is the transpose of PyTorch's nn.Linear.weight, so the math matches
    y = x @ W_torch.T + b exactly.
    """
    B, n_latent = embedding.shape
    num_of_class = weight.shape[1]

    # Tiny problems: launch + per-step overhead dwarfs the matmul; plain XLA
    # dot+bias is already optimal there. Override with use_pallas=True to force.
    if use_pallas is None:
        use_pallas = (B * n_latent * num_of_class) > 1_000_000
    if not use_pallas:
        return embedding @ weight + bias

    # --- Lane-align only the (tiny) weight / bias for the MXU. ----------------
    n_pad = _round_up(num_of_class, _LANE)
    if n_pad != num_of_class:
        weight = jnp.pad(weight, ((0, 0), (0, n_pad - num_of_class)))
        bias = jnp.pad(bias, (0, n_pad - num_of_class))
    bias2d = bias.reshape(1, n_pad)

    # --- Batch tile: large (few grid steps), multiple of 8, but capped so the
    # grid keeps >= 2 steps whenever possible (v7x has 2 TensorCores). ---------
    half = -(-B // 2)                                   # ceil(B / 2)
    tb = min(block_batch, _round_up(half, _SUBLANE))
    tb = max(tb, _SUBLANE)
    grid = (pl.cdiv(B, tb),)                            # ragged last tile is masked

    itemsize = embedding.dtype.itemsize
    cost = pl.CostEstimate(
        flops=2 * B * n_latent * num_of_class,
        transcendentals=0,
        bytes_accessed=(B * n_latent * itemsize                # x
                        + n_latent * num_of_class * itemsize   # W (read once)
                        + num_of_class * itemsize              # bias
                        + B * num_of_class * itemsize),        # out (narrow)
    )

    out = pl.pallas_call(
        _linear_kernel,
        out_shape=jax.ShapeDtypeStruct((B, num_of_class), embedding.dtype),
        grid_spec=pltpu.PrefetchScalarGridSpec(
            num_scalar_prefetch=0,
            grid=grid,
            in_specs=[
                # Activations: one batch tile per grid step (double-buffered).
                pl.BlockSpec((tb, n_latent), lambda i: (i, 0)),
                # Weight + bias: constant block index -> resident in VMEM.
                pl.BlockSpec((n_latent, n_pad), lambda i: (0, 0)),
                pl.BlockSpec((1, n_pad), lambda i: (0, 0)),
            ],
            # Narrow output block: last dim equals the full class dim (legal),
            # so each row writes num_of_class*4 bytes instead of 512 B.
            out_specs=pl.BlockSpec((tb, num_of_class), lambda i: (i, 0)),
        ),
        compiler_params=pltpu.CompilerParams(
            # Independent batch tiles -> shardable across v7x's 2 TensorCores.
            dimension_semantics=("parallel",),
        ),
        cost_estimate=cost,
    )(embedding, weight, bias2d)

    return out


if __name__ == "__main__":
    # Small, deterministic example consistent with the module's forward.
    n_latent = 32
    num_of_class = 4
    batch = 8

    key = jax.random.PRNGKey(0)
    k_x, k_w, k_b = jax.random.split(key, 3)

    embedding = jax.random.normal(k_x, (batch, n_latent), dtype=jnp.float32)
    # Deterministic parameter init (mimics PyTorch's uniform(-1/sqrt(fan_in), 1/sqrt(fan_in))).
    bound = 1.0 / (n_latent ** 0.5)
    weight = jax.random.uniform(k_w, (n_latent, num_of_class),
                                dtype=jnp.float32, minval=-bound, maxval=bound)
    bias = jax.random.uniform(k_b, (num_of_class,),
                              dtype=jnp.float32, minval=-bound, maxval=bound)

    # Force the Pallas path even at this toy size so the kernel is exercised.
    out = net_cell_forward(embedding, weight, bias, use_pallas=True)
    jax.block_until_ready(out)
    ref = embedding @ weight + bias
    assert out.shape == (batch, num_of_class)
    assert jnp.allclose(out, ref, atol=1e-5, rtol=1e-5)

    # Multi-tile path: batch not a multiple of the tile -> cdiv grid with a
    # ragged (masked) last tile, resident weight/bias, >= 2 parallel steps.
    emb2 = jax.random.normal(jax.random.PRNGKey(1), (1000, n_latent), dtype=jnp.float32)
    out2 = net_cell_forward(emb2, weight, bias, use_pallas=True)
    jax.block_until_ready(out2)
    ref2 = emb2 @ weight + bias
    assert out2.shape == (1000, num_of_class)
    assert jnp.allclose(out2, ref2, atol=1e-5, rtol=1e-5)

    # Default size gate: toy problem falls back to plain XLA dot (same result).
    out3 = net_cell_forward(embedding, weight, bias)
    assert jnp.allclose(out3, ref, atol=1e-5, rtol=1e-5)

    print("KERNEL_OK")
</pallas_src>

<mosaic_0001>
module attributes {stable_mosaic.version = 11 : i64} {
  func.func @_linear_kernel(%arg0: i32, %arg1: memref<8x32xf32, #tpu.memory_space<vmem>>, %arg2: memref<32x128xf32, #tpu.memory_space<vmem>>, %arg3: memref<1x128xf32, #tpu.memory_space<vmem>>, %arg4: memref<8x4xf32, #tpu.memory_space<vmem>>) attributes {dimension_semantics = [#tpu.dimension_semantics<parallel>], iteration_bounds = array<i64: 1>, scalar_prefetch = 0 : i64, scratch_operands = 0 : i64, tpu.core_type = #tpu.core_type<tc>, window_params = [{transform_indices = @transform_0, window_bounds = array<i64: 8, 32>}, {pipeline_mode = #tpu.pipeline_mode<synchronous>, transform_indices = @transform_1, window_bounds = array<i64: 32, 128>}, {pipeline_mode = #tpu.pipeline_mode<synchronous>, transform_indices = @transform_2, window_bounds = array<i64: 1, 128>}, {transform_indices = @transform_3, window_bounds = array<i64: 8, 4>}]} {
    %c0 = arith.constant 0 : index
    %c0_0 = arith.constant 0 : index
    %0 = vector.load %arg1[%c0, %c0_0] : memref<8x32xf32, #tpu.memory_space<vmem>>, vector<8x32xf32>
    %c0_1 = arith.constant 0 : index
    %c0_2 = arith.constant 0 : index
    %1 = vector.load %arg2[%c0_1, %c0_2] : memref<32x128xf32, #tpu.memory_space<vmem>>, vector<32x128xf32>
    %cst = arith.constant dense<0.000000e+00> : vector<8x128xf32>
    %2 = tpu.matmul %0, %1, %cst {dimension_numbers = #tpu.dot_dimension_numbers<[1], [0], [0], [1], [0, 0, 1, 1], [], []>} : vector<8x32xf32>, vector<32x128xf32>, vector<8x128xf32> -> vector<8x128xf32>
    %c0_3 = arith.constant 0 : index
    %c0_4 = arith.constant 0 : index
    %3 = vector.load %arg3[%c0_3, %c0_4] : memref<1x128xf32, #tpu.memory_space<vmem>>, vector<1x128xf32>
    %4 = vector.broadcast %3 : vector<1x128xf32> to vector<8x128xf32>
    %5 = arith.addf %2, %4 : vector<8x128xf32>
    %6 = vector.extract_strided_slice %5 {offsets = [0, 0], sizes = [8, 4], strides = [1, 1]} : vector<8x128xf32> to vector<8x4xf32>
    %c0_5 = arith.constant 0 : index
    %c0_6 = arith.constant 0 : index
    %7 = vector.load %arg4[%c0_5, %c0_6] : memref<8x4xf32, #tpu.memory_space<vmem>>, vector<8x4xf32>
    tpu.vector_store %arg4[%c0_5, %c0_6], %6 {strides = array<i32>} : memref<8x4xf32, #tpu.memory_space<vmem>>, vector<8x4xf32>,
    return
  }
  func.func @transform_0(%arg0: i32) -> (i32, i32) {
    %c0_i32 = arith.constant 0 : i32
    %c0_i32_0 = arith.constant 0 : i32
    return %arg0, %c0_i32 : i32, i32
  }
  func.func @transform_1(%arg0: i32) -> (i32, i32) {
    %c0_i32 = arith.constant 0 : i32
    %c0_i32_0 = arith.constant 0 : i32
    %c0_i32_1 = arith.constant 0 : i32
    return %c0_i32, %c0_i32_0 : i32, i32
  }
  func.func @transform_2(%arg0: i32) -> (i32, i32) {
    %c0_i32 = arith.constant 0 : i32
    %c0_i32_0 = arith.constant 0 : i32
    %c0_i32_1 = arith.constant 0 : i32
    return %c0_i32, %c0_i32_0 : i32, i32
  }
  func.func @transform_3(%arg0: i32) -> (i32, i32) {
    %c0_i32 = arith.constant 0 : i32
    %c0_i32_0 = arith.constant 0 : i32
    return %arg0, %c0_i32 : i32, i32
  }
}

</mosaic_0001>

<llo_original>
// kernel: tpu_custom_call.1
$region0: #{tpu_custom_call.1}
  #allocation0 [shape = 'u32[]', space=smem, size = 0x4, offset = 0x4, fixed_abs, tag = 'smem constant byte address 0x4 - core index']
  #allocation1 [shape = 'u32[144,128]{1,0:T(1,128)}', space=vmem, size = 0x12000, scoped, tag = 'internal scratch']
  %s0 = inlined_call_operand.hbm [shape: f32[8,32], index: 0, kind: input, shape index: {}]
  %s1 = inlined_call_operand.hbm [shape: f32[32,128], index: 1, kind: input, shape index: {}]
  %s2 = inlined_call_operand.vmem [shape: f32[1,128], index: 2, kind: input, shape index: {}]
  %s3 = inlined_call_operand.vmem [shape: f32[8,4], index: 3, kind: output, shape index: {}]
  %s4 = sld [smem:[#allocation0]]
  $region30: #{tpu_custom_call.1} parent=0
    _
  %s6 = ssub.s32 1, %s4
  %s7 = scalar_select 0, %s6, %s4
  $region1: #{tpu_custom_call.1} parent=0
    #allocation2 [shape = 'u8[4096]{0}', space=vmem, size = 0x1000, scoped, tag = 'input window, operand 0, single buffered']
    #allocation3 [shape = 's32[1]{0}', space=sflag, size = 0x4, scoped, tag = 'scoped memory for tpu_custom_call.1']
    #allocation4 [shape = 'u8[16384]{0}', space=vmem, size = 0x4000, scoped, tag = 'input window, operand 1, single buffered']
    #allocation5 [shape = 's32[1]{0}', space=sflag, size = 0x4, scoped, tag = 'scoped memory for tpu_custom_call.1']
    %8 = vsyncpa [#allocation3], 0
    %9 = vsyncpa [#allocation5], 0
    // Predicated region
    $region2: #{tpu_custom_call.1} parent=1 // pred_check
      _
    $region3: #{tpu_custom_call.1} parent=1 // pred_check_branch
      %11 = sbr.rel (0) target = $region5
    $region4: #{tpu_custom_call.1} parent=1 // pred_region
      %s13 = ssub.s32 128, 128
      %14 = vsyncadd [#allocation3], %s13
      %s16 = sshll.u32 [#allocation2], 4
      %s17 = int_to_ptr.vmem [resolvable:$true] %s16
      %19 = dma.hbm_to_vmem [thread:$0]  %s0, 128, %s17, [#allocation3]
    $region5: #{tpu_custom_call.1} parent=1 // pred_fallthru
      _
    // Predicated region
    $region6: #{tpu_custom_call.1} parent=1 // pred_check
      _
    $region7: #{tpu_custom_call.1} parent=1 // pred_check_branch
      %21 = sbr.rel (0) target = $region9
    $region8: #{tpu_custom_call.1} parent=1 // pred_region
      %s23 = ssub.s32 512, 512
      %24 = vsyncadd [#allocation5], %s23
      %s25 = sshll.u32 [#allocation4], 4
      %s26 = int_to_ptr.vmem [resolvable:$true] %s25
      %31 = dma.hbm_to_vmem [thread:$0]  %s1, 512, %s26, [#allocation5], 128, 128, 8
    $region9: #{tpu_custom_call.1} parent=1 // pred_fallthru
      _
    // Predicated region
    $region10: #{tpu_custom_call.1} parent=1 // pred_check
      _
    $region11: #{tpu_custom_call.1} parent=1 // pred_check_branch
      %33 = sbr.rel (0) target = $region13
    $region12: #{tpu_custom_call.1} parent=1 // pred_region
      _
    $region13: #{tpu_custom_call.1} parent=1 // pred_fallthru
      _
    // Predicated region
    $region14: #{tpu_custom_call.1} parent=1 // pred_check
      _
    $region15: #{tpu_custom_call.1} parent=1 // pred_check_branch
      %35 = sbr.rel (0) target = $region17
    $region16: #{tpu_custom_call.1} parent=1 // pred_region
      %36 = dma.done [#allocation3], 128
    $region17: #{tpu_custom_call.1} parent=1 // pred_fallthru
      _
    // Predicated region
    $region18: #{tpu_custom_call.1} parent=1 // pred_check
      _
    $region19: #{tpu_custom_call.1} parent=1 // pred_check_branch
      %38 = sbr.rel (0) target = $region21
    $region20: #{tpu_custom_call.1} parent=1 // pred_region
      %39 = dma.done [#allocation5], 512
    $region21: #{tpu_custom_call.1} parent=1 // pred_fallthru
      _
    %v40 = vld [vmem:[#allocation2] sm:$0xff]
    %v41 = vld [vmem:[#allocation4] sm:$0xff]
    %v42 = vld [vmem:[#allocation4 + $0x8] sm:$0xff]
    %v43 = vld [vmem:[#allocation4 + $0x10] sm:$0xff]
    %v44 = vld [vmem:[#allocation4 + $0x18] sm:$0xff]
    %v45 = vld [vmem:[%s2] sm:$0x1]
    %v47 = vlaneseq
    %v48 = vshrl.u32 %v47, 7
    %v49 = vsub.s32 0, %v48
    %v50 = vrot.slane %v45, %v49
    %vm52 = vcmask 261120
    %v54 = vsel %vm52, %v40, 0
    %56 = vmatprep.subr.mxu0 0.0
    %57 = vmatpush1.msra.mxu0 0.0
    %58 = vmatprep.subr.mxu0 0.0
    %59 = vmatpush1.msra.mxu0 0.0
    %60 = vmatprep.subr.mxu0 0.0
    %61 = vmatpush1.msra.mxu0 0.0
    %62 = vmatprep.subr.mxu0 0.0
    %63 = vmatpush1.msra.mxu0 0.0
    %64 = vmatprep.subr.mxu0 0.0
    %65 = vmatpush1.msra.mxu0 0.0
    %66 = vmatprep.subr.mxu0 0.0
    %67 = vmatpush1.msra.mxu0 0.0
    %68 = vmatprep.subr.mxu0 0.0
    %69 = vmatpush1.msra.mxu0 0.0
    %70 = vmatprep.subr.mxu0 0.0
    %71 = vmatpush1.msra.mxu0 0.0
    %72 = vmatprep.subr.mxu0 0.0
    %73 = vmatpush1.msra.mxu0 0.0
    %74 = vmatprep.subr.mxu0 0.0
    %75 = vmatpush1.msra.mxu0 0.0
    %76 = vmatprep.subr.mxu0 0.0
    %77 = vmatpush1.msra.mxu0 0.0
    %78 = vmatprep.subr.mxu0 0.0
    %79 = vmatpush1.msra.mxu0 0.0
    %80 = vmatprep.subr.mxu0 0.0
    %81 = vmatpush1.msra.mxu0 %v44
    %82 = vmatprep.subr.mxu0 0.0
    %83 = vmatpush1.msra.mxu0 %v43
    %84 = vmatprep.subr.mxu0 0.0
    %85 = vmatpush1.msra.mxu0 %v42
    %86 = vmatprep.subr.mxu0 0.0
    %87 = vmatpush1.msra.mxu0 %v41
    %88 = vmatprep.subr.mxu0 0.0
    %89 = vmatpush2.msra.mxu0 0.0
    %90 = vmatprep.subr.mxu0 0.0
    %91 = vmatpush2.msra.mxu0 0.0
    %92 = vmatprep.subr.mxu0 0.0
    %93 = vmatpush2.msra.mxu0 0.0
    %94 = vmatprep.subr.mxu0 0.0
    %95 = vmatpush2.msra.mxu0 0.0
    %96 = vmatprep.subr.mxu0 0.0
    %97 = vmatpush2.msra.mxu0 0.0
    %98 = vmatprep.subr.mxu0 0.0
    %99 = vmatpush2.msra.mxu0 0.0
    %100 = vmatprep.subr.mxu0 0.0
    %101 = vmatpush2.msra.mxu0 0.0
    %102 = vmatprep.subr.mxu0 0.0
    %103 = vmatpush2.msra.mxu0 0.0
    %104 = vmatprep.subr.mxu0 0.0
    %105 = vmatpush2.msra.mxu0 0.0
    %106 = vmatprep.subr.mxu0 0.0
    %107 = vmatpush2.msra.mxu0 0.0
    %108 = vmatprep.subr.mxu0 0.0
    %109 = vmatpush2.msra.mxu0 0.0
    %110 = vmatprep.subr.mxu0 0.0
    %111 = vmatpush2.msra.mxu0 0.0
    %112 = vmatprep.subr.mxu0 0.0
    %113 = vmatpush2.msra.mxu0 0.0
    %114 = vmatprep.subr.mxu0 0.0
    %115 = vmatpush2.msra.mxu0 0.0
    %116 = vmatprep.subr.mxu0 0.0
    %117 = vmatpush2.msra.mxu0 0.0
    %118 = vmatprep.subr.mxu0 0.0
    %119 = vmatpush2.msra.mxu0 0.0
    %120 = vmatprep.mubr.f32.mxu0 0.0
    %121 = vmatmul.mubr.f32.gmra.mxu0 %v54
    %v122 = vpop.f32.mrf.mxu0
    %v123 = vadd.f32 %v50, %v122
    %v124 = vpop.f32.mrf.mxu0
    %125 = vdwg.mxu0
    %vm126 = vcmask 31744
    %127 = vst.msk [vmem:[%s3] sm:$0xff] %vm126, %v123
    // Predicated region
    $region22: #{tpu_custom_call.1} parent=1 // pred_check
      _
    $region23: #{tpu_custom_call.1} parent=1 // pred_check_branch
      %129 = sbr.rel (0) target = $region25
    $region24: #{tpu_custom_call.1} parent=1 // pred_region
      _
    $region25: #{tpu_custom_call.1} parent=1 // pred_fallthru
      _
    // Predicated region
    $region26: #{tpu_custom_call.1} parent=1 // pred_check
      _
    $region27: #{tpu_custom_call.1} parent=1 // pred_check_branch
      %131 = sbr.rel (0) target = $region29
    $region28: #{tpu_custom_call.1} parent=1 // pred_region
      _
    $region29: #{tpu_custom_call.1} parent=1 // pred_fallthru
      _
    %132 = vsyncpa [#allocation3], 1
    %133 = vsyncpa [#allocation5], 1

</llo_original>
